<compile_context>
chip_gen: v7x
topology: tpu7x:2x2x1
jax: 0.10.0
libtpu: 0.0.40
codegen_flags: <defaults>
</compile_context>

<pallas_src>
import math

import jax
import jax.numpy as jnp
from jax import lax
from jax.experimental import pallas as pl
from jax.experimental.pallas import tpu as pltpu


# ----------------------------------------------------------------------------
# Kernels
# ----------------------------------------------------------------------------
def _axpy_kernel(d_ref, x_ref, emb_ref, o_ref):
    """out = x + d * emb.  emb block is either (1, ft) (broadcast over the
    batch rows of the tile) or the same shape as x (pre-gathered rows)."""
    o_ref[...] = (x_ref[...] + d_ref[0] * emb_ref[...]).astype(o_ref.dtype)


def _gather_axpy_kernel(d_ref, pos_ref, x_ref, emb_ref, o_ref):
    """out = x + d * table[pos], gather vectorized as a one-hot MXU matmul.

    pos_ref: (rt, 1) int32 (VMEM); x_ref/o_ref: (rt, D); emb_ref: (max_len, D).
    Out-of-range indices produce an all-zero one-hot row, i.e. contribute 0
    (PyTorch's nn.Embedding would raise; there is no unsafe access here).
    """
    max_len = emb_ref.shape[0]
    idx = pos_ref[...]                                          # (rt, 1)
    cols = lax.broadcasted_iota(jnp.int32, (1, max_len), 1)     # (1, max_len)
    onehot = (idx == cols).astype(emb_ref.dtype)                # (rt, max_len)
    rows = jnp.dot(onehot, emb_ref[...],
                   preferred_element_type=jnp.float32)          # (rt, D) f32
    o_ref[...] = (x_ref[...] + d_ref[0] * rows).astype(o_ref.dtype)


# ----------------------------------------------------------------------------
# Helpers
# ----------------------------------------------------------------------------
def make_embedding_weight(max_len: int, d_model: int, dtype=jnp.float32):
    """Deterministic sinusoidal init, matching the PyTorch __init__."""
    position = jnp.arange(max_len, dtype=jnp.float32)[:, None]
    div = jnp.exp(jnp.arange(0, d_model, 2, dtype=jnp.float32)
                  * (-math.log(10000.0) / d_model))
    w = jnp.zeros((max_len, d_model), dtype=jnp.float32)
    w = w.at[:, 0::2].set(jnp.sin(position * div))
    w = w.at[:, 1::2].set(jnp.cos(position * div))
    return w.astype(dtype)


def _divisors(n):
    ds = set()
    i = 1
    while i * i <= n:
        if n % i == 0:
            ds.add(i)
            ds.add(n // i)
        i += 1
    return ds


def _sublane_multiple(dtype):
    # Sublane packing: 8 rows for 4-byte dtypes, 16 for 2-byte, 32 for 1-byte.
    return max(8, 32 // jnp.dtype(dtype).itemsize)


def _choose_tiles(B, F, itemsize, sub_mult, target_bytes):
    """Pick (batch_tile, feature_tile) for a flattened (B, F) array.

    Legal tiles: batch_tile divides B and is a sublane multiple (or == B);
    feature_tile divides F and is a lane (128) multiple (or == F).  Prefer the
    largest tile <= target_bytes and prefer a grid with >= 2 steps so v7x
    megacore has something to shard; never hand back an unbounded whole-array
    block when a legal chunking exists.
    """
    bt_cands = sorted({d for d in _divisors(B) if d % sub_mult == 0} | {B})
    ft_cands = sorted({d for d in _divisors(F) if d % 128 == 0} | {F})
    best, best_key = (B, F), None
    for bt in bt_cands:
        for ft in ft_cands:
            tile = bt * ft * itemsize
            fits = tile <= target_bytes
            multi_step = (B // bt) * (F // ft) >= 2
            key = (fits, fits and multi_step, tile if fits else -tile, ft)
            if best_key is None or key > best_key:
                best, best_key = (bt, ft), key
    return best


def _pick_rows(R, row_bytes, sub_mult, target_bytes):
    """Pick a row-tile for a flattened (R, D) array (rows on the sublane axis)."""
    cands = sorted({d for d in _divisors(R) if d % sub_mult == 0} | {R})
    best, best_key = R, None
    for rt in cands:
        tile = rt * row_bytes
        fits = tile <= target_bytes
        multi_step = (R // rt) >= 2
        key = (fits, fits and multi_step, tile if fits else -tile)
        if best_key is None or key > best_key:
            best, best_key = rt, key
    return best


# ----------------------------------------------------------------------------
# Forward wrappers
# ----------------------------------------------------------------------------
def _streaming_axpy(x, d_arr, emb, *, broadcast_emb):
    """out = x + d * emb.

    x: (B, N, D).  emb: (N, D) broadcast over the batch (broadcast_emb=True) or
    (B, N, D) elementwise (broadcast_emb=False).  Both are presented flattened
    to (rows, N*D) so stores are lane-dense whenever a 128-multiple feature
    tile exists.  Grid order is (feature-chunk, batch-chunk) so the broadcast
    emb block stays resident while the batch axis sweeps.
    """
    B, N, D = x.shape
    F = N * D
    dtype = x.dtype
    itemsize = jnp.dtype(dtype).itemsize
    sub_mult = _sublane_multiple(dtype)
    # 2 big streams (x, out) vs 3 (x, emb, out): size tiles so the
    # double-buffered footprint stays well under v7x's 64 MiB VMEM.
    target = (8 << 20) if broadcast_emb else (5 << 20)
    bt, ft = _choose_tiles(B, F, itemsize, sub_mult, target)
    nb, nf = B // bt, F // ft

    x2 = x.reshape(B, F)
    x_spec = pl.BlockSpec((bt, ft), lambda j, i: (i, j))
    if broadcast_emb:
        emb2 = emb.reshape(1, F)
        emb_spec = pl.BlockSpec((1, ft), lambda j, i: (0, j))
        emb_buf_bytes = 2 * ft * itemsize
    else:
        emb2 = emb.reshape(B, F)
        emb_spec = pl.BlockSpec((bt, ft), lambda j, i: (i, j))
        emb_buf_bytes = 2 * bt * ft * itemsize

    tile_bytes = bt * ft * itemsize
    vmem_need = 4 * tile_bytes + emb_buf_bytes + (2 << 20)
    cost = pl.CostEstimate(
        flops=2 * B * F,
        transcendentals=0,
        bytes_accessed=(x2.size + emb2.size + B * F) * itemsize)

    out = pl.pallas_call(
        _axpy_kernel,
        out_shape=jax.ShapeDtypeStruct((B, F), dtype),
        grid_spec=pltpu.PrefetchScalarGridSpec(
            num_scalar_prefetch=0,
            grid=(nf, nb),
            in_specs=[
                pl.BlockSpec(memory_space=pltpu.MemorySpace.SMEM),  # d scalar
                x_spec,
                emb_spec,
            ],
            out_specs=x_spec,
        ),
        compiler_params=pltpu.CompilerParams(
            dimension_semantics=("parallel", "parallel"),
            vmem_limit_bytes=int(min(max(vmem_need, 32 << 20), 100 << 20)),
        ),
        cost_estimate=cost,
    )(d_arr, x2, emb2)
    return out.reshape(B, N, D)


def _forward_explicit_pos(x, d_arr, emb_weight, pos):
    """out[b, n] = x[b, n] + d * table[pos[b, n]] for per-(batch, seq) indices."""
    B, N, D = x.shape
    dtype = x.dtype
    itemsize = jnp.dtype(dtype).itemsize
    max_len = emb_weight.shape[0]
    R = B * N

    sub_mult = _sublane_multiple(dtype)
    rt = _pick_rows(R, D * itemsize, sub_mult, target_bytes=4 << 20)

    table_bytes = max_len * D * itemsize
    tile_bytes = rt * D * itemsize
    scratch_bytes = rt * max(max_len, 128) * itemsize + rt * max(D, 128) * 4
    vmem_need = (4 * tile_bytes + 2 * table_bytes + 2 * rt * 4
                 + scratch_bytes + (2 << 20))

    if vmem_need > (48 << 20) or max_len > 1024:
        # Table (or one-hot) too large to keep resident in VMEM -- notably on
        # v7x (64 MiB) -- or the one-hot contraction would dominate: gather the
        # rows with XLA in HBM and reuse the gather-free streaming kernel.
        # TODO(synk): replace with an HBM-resident table (memory_space=pl.ANY)
        # + pipelined make_async_copy row gathers to avoid the extra HBM
        # round-trip for the gathered rows.
        gathered = jnp.take(emb_weight, pos.reshape(-1), axis=0).reshape(B, N, D)
        return _streaming_axpy(x, d_arr, gathered, broadcast_emb=False)

    x2 = x.reshape(R, D)
    pos2 = pos.reshape(R, 1)
    row_spec = pl.BlockSpec((rt, D), lambda i: (i, 0))
    # NOTE: when D < 128 the (rt, D) output block produces masked stores; for
    # this module's default d_model=512 the stores are lane-dense.
    cost = pl.CostEstimate(
        flops=2 * R * D * (max_len + 1),
        transcendentals=0,
        bytes_accessed=(2 * R * D + max_len * D) * itemsize + R * 4)

    out = pl.pallas_call(
        _gather_axpy_kernel,
        out_shape=jax.ShapeDtypeStruct((R, D), dtype),
        grid_spec=pltpu.PrefetchScalarGridSpec(
            num_scalar_prefetch=0,
            grid=(R // rt,),
            in_specs=[
                pl.BlockSpec(memory_space=pltpu.MemorySpace.SMEM),  # d scalar
                pl.BlockSpec((rt, 1), lambda i: (i, 0)),            # pos
                row_spec,                                           # x
                pl.BlockSpec((max_len, D), lambda i: (0, 0)),       # table
            ],
            out_specs=row_spec,
        ),
        compiler_params=pltpu.CompilerParams(
            dimension_semantics=("parallel",),
            vmem_limit_bytes=int(max(vmem_need, 32 << 20)),
        ),
        cost_estimate=cost,
    )(d_arr, pos2, x2, emb_weight)
    return out.reshape(B, N, D)


def learned_embedding_forward(x, d, emb_weight, pos=None):
    """Pallas forward for LearnedEmbedding: x + d * embedding(pos)."""
    B, N, D = x.shape
    max_len, d_model = emb_weight.shape
    assert d_model == D
    emb_weight = emb_weight.astype(x.dtype)
    d_arr = jnp.asarray(d, dtype=jnp.float32).reshape((1,))

    if pos is None:
        if N > max_len:
            raise ValueError(f"sequence length {N} exceeds max_len {max_len}")
        # Default positions arange(N) broadcast over the batch: no gather at
        # all, just stream the first N table rows.
        return _streaming_axpy(x, d_arr, emb_weight[:N], broadcast_emb=True)

    pos = jnp.asarray(pos, dtype=jnp.int32)
    if pos.ndim == 1:
        # Positions shared across the batch: gather the N rows once in the
        # wrapper (tiny XLA gather) and use the gather-free streaming kernel.
        # Keeps the grid fully parallel (v7x megacore) and the table out of
        # VMEM.
        rows = jnp.take(emb_weight, pos, axis=0)
        return _streaming_axpy(x, d_arr, rows, broadcast_emb=True)

    pos = jnp.broadcast_to(pos, (B, N))
    return _forward_explicit_pos(x, d_arr, emb_weight, pos)


# ----------------------------------------------------------------------------
# Demo / correctness check
# ----------------------------------------------------------------------------
if __name__ == "__main__":
    B, N, D, MAX_LEN = 2, 8, 32, 10
    key = jax.random.PRNGKey(0)
    kx, kp = jax.random.split(key)
    x = jax.random.normal(kx, (B, N, D), dtype=jnp.float32)
    d = 0.5
    emb_w = make_embedding_weight(MAX_LEN, D)

    # 1) Default pos = arange(N) broadcast over batch (gather-free fast path).
    out = jax.block_until_ready(learned_embedding_forward(x, d, emb_w))
    pos_def = jnp.broadcast_to(jnp.arange(N, dtype=jnp.int32)[None, :], (B, N))
    ref = x + jnp.float32(d) * emb_w[pos_def]
    assert out.shape == (B, N, D)
    assert jnp.allclose(out, ref, atol=1e-6, rtol=1e-6)

    # 2) Explicit per-batch positions (in-kernel vectorized one-hot gather).
    #    Tolerance allows for the MXU's f32 pass decomposition; gather errors
    #    (wrong rows) would be O(0.1) and still fail this check.
    pos2 = jax.random.randint(kp, (B, N), 0, MAX_LEN, dtype=jnp.int32)
    out2 = jax.block_until_ready(learned_embedding_forward(x, d, emb_w, pos=pos2))
    ref2 = x + jnp.float32(d) * emb_w[pos2]
    assert out2.shape == (B, N, D)
    assert jnp.allclose(out2, ref2, atol=5e-3, rtol=1e-5)

    # 3) Explicit shared 1-D positions (wrapper gather + streaming fast path).
    pos3 = jnp.flip(jnp.arange(N, dtype=jnp.int32))
    out3 = jax.block_until_ready(learned_embedding_forward(x, d, emb_w, pos=pos3))
    ref3 = x + jnp.float32(d) * emb_w[pos3][None]
    assert jnp.allclose(out3, ref3, atol=1e-6, rtol=1e-6)

    print("KERNEL_OK")
</pallas_src>

<mosaic_0001>
module attributes {stable_mosaic.version = 11 : i64} {
  func.func @_axpy_kernel(%arg0: i32, %arg1: i32, %arg2: memref<1xf32, #tpu.memory_space<smem>>, %arg3: memref<2x128xf32, #tpu.memory_space<vmem>>, %arg4: memref<1x128xf32, #tpu.memory_space<vmem>>, %arg5: memref<2x128xf32, #tpu.memory_space<vmem>>) attributes {dimension_semantics = [#tpu.dimension_semantics<parallel>, #tpu.dimension_semantics<parallel>], iteration_bounds = array<i64: 2, 1>, scalar_prefetch = 0 : i64, scratch_operands = 0 : i64, tpu.core_type = #tpu.core_type<tc>, window_params = [{transform_indices = @transform_0, window_bounds = array<i64: 1>}, {transform_indices = @transform_1, window_bounds = array<i64: 2, 128>}, {transform_indices = @transform_2, window_bounds = array<i64: 1, 128>}, {transform_indices = @transform_3, window_bounds = array<i64: 2, 128>}]} {
    %c0 = arith.constant 0 : index
    %c0_0 = arith.constant 0 : index
    %0 = vector.load %arg3[%c0, %c0_0] : memref<2x128xf32, #tpu.memory_space<vmem>>, vector<2x128xf32>
    %c0_1 = arith.constant 0 : index
    %1 = memref.load %arg2[%c0_1] : memref<1xf32, #tpu.memory_space<smem>>
    %c0_2 = arith.constant 0 : index
    %c0_3 = arith.constant 0 : index
    %2 = vector.load %arg4[%c0_2, %c0_3] : memref<1x128xf32, #tpu.memory_space<vmem>>, vector<1x128xf32>
    %3 = vector.broadcast %1 : f32 to vector<1x128xf32>
    %4 = arith.mulf %3, %2 : vector<1x128xf32>
    %5 = vector.broadcast %4 : vector<1x128xf32> to vector<2x128xf32>
    %6 = arith.addf %0, %5 : vector<2x128xf32>
    %c0_4 = arith.constant 0 : index
    %c0_5 = arith.constant 0 : index
    %7 = vector.load %arg5[%c0_4, %c0_5] : memref<2x128xf32, #tpu.memory_space<vmem>>, vector<2x128xf32>
    tpu.vector_store %arg5[%c0_4, %c0_5], %6 {strides = array<i32>} : memref<2x128xf32, #tpu.memory_space<vmem>>, vector<2x128xf32>,
    return
  }
  func.func @transform_0(%arg0: i32, %arg1: i32) -> i32 {
    %c0_i32 = arith.constant 0 : i32
    %c0_i32_0 = arith.constant 0 : i32
    return %c0_i32 : i32
  }
  func.func @transform_1(%arg0: i32, %arg1: i32) -> (i32, i32) {
    %c0_i32 = arith.constant 0 : i32
    return %arg1, %arg0 : i32, i32
  }
  func.func @transform_2(%arg0: i32, %arg1: i32) -> (i32, i32) {
    %c0_i32 = arith.constant 0 : i32
    %c0_i32_0 = arith.constant 0 : i32
    return %c0_i32, %arg0 : i32, i32
  }
  func.func @transform_3(%arg0: i32, %arg1: i32) -> (i32, i32) {
    %c0_i32 = arith.constant 0 : i32
    return %arg1, %arg0 : i32, i32
  }
}

</mosaic_0001>

<llo_original>
// kernel: tpu_custom_call.1
$region0: #{tpu_custom_call.1}
  #allocation0 [shape = 'u32[]', space=smem, size = 0x4, offset = 0x4, fixed_abs, tag = 'smem constant byte address 0x4 - core index']
  #allocation1 [shape = 'u32[144,128]{1,0:T(1,128)}', space=vmem, size = 0x12000, scoped, tag = 'internal scratch']
  #allocation2 [shape = 'f32[1]{0:T(128)S(6)}', space=smem, size = 0x200, scoped, tag = 'scoped memory for tpu_custom_call.1']
  %s0 = inlined_call_operand.<no memory space> [shape: f32[1], index: 0, kind: input, shape index: {}]
  %s1 = inlined_call_operand.hbm [shape: f32[2,256], index: 1, kind: input, shape index: {}]
  %s2 = inlined_call_operand.vmem [shape: f32[1,256], index: 2, kind: input, shape index: {}]
  %s3 = inlined_call_operand.hbm [shape: f32[2,256], index: 3, kind: output, shape index: {}]
  %s4 = sld [smem:[#allocation0]]
  $region49: #{tpu_custom_call.1} parent=0
    _
  %s6 = ssub.s32 1, %s4
  %s7 = scalar_select 0, %s6, %s4
  %8 = sst [smem:[#allocation2]] %s0
  $region1: #{tpu_custom_call.1} parent=0
    #allocation3 [shape = 'u8[2048]{0}', space=vmem, size = 0x800, scoped, tag = 'input window, operand 1']
    #allocation4 [shape = 's32[2]{0}', space=sflag, size = 0x8, scoped, tag = 'scoped memory for tpu_custom_call.1']
    #allocation5 [shape = 's32[2]{0}', space=sflag, size = 0x8, scoped, tag = 'scoped memory for tpu_custom_call.1']
    #allocation6 [shape = 'u8[2048]{0}', space=vmem, size = 0x800, scoped, tag = 'output window, operand 0']
    %9 = vsyncpa [#allocation4], 0
    %s10 = scalar_lea.sflag [#allocation4], 1
    %11 = vsyncpa %s10, 0
    %12 = vsyncpa [#allocation5], 0
    %s13 = scalar_lea.sflag [#allocation5], 1
    %14 = vsyncpa %s13, 0
    loop: start=0, step=1, limit=4
    $region2: #{tpu_custom_call.1} parent=1 // loop_pre_header
      _
    $region3: #{tpu_custom_call.1} parent=1 // loop_header
      %s16 = sphi 0, %s20
      %p17 = scmp.ge.s32.totalorder %s16, 4
      %s23 = sphi 0, %s35
      %s24 = sphi 0, %s31
      %s25 = sphi 0, %s23
      %s26 = sphi 0, %s24
      %s27 = sphi 0, %s25
      %s28 = sphi 0, %s26
      %s36 = sphi 0, %s36
      %s38 = sphi 0, %s36
      %s39 = sphi 0, %s38
      %s53 = sphi 0, %s39
      %s61 = sphi 0, %s63
      %s64 = sphi 0, %s61
      %s65 = sphi 0, %s64
      %s81 = sphi 0, %s65
      %s87 = sphi 0, %s89
      %s90 = sphi 0, %s87
      %s91 = sphi 0, %s90
      %s107 = sphi 0, %s91
      %s115 = sphi 0, %s117
      %s118 = sphi 0, %s115
      %s119 = sphi 0, %s118
      %s135 = sphi 0, %s119
    $region4: #{tpu_custom_call.1} parent=1 // loop_header_branch
      %19 = sbr.rel (%p17) target = $region8
    $region5: #{tpu_custom_call.1} parent=1 // loop_body
      %s21 = ssub.s32 %s16, 1
      %s22 = ssub.s32 %s16, 2
      %s29 = sadd.s32 1, %s24
      %p30 = scmp.ge.s32.totalorder %s29, 1
      %s31 = scalar_select %p30, 0, %s29
      %s32 = sadd.s32 1, %s23
      %s33 = scalar_select %p30, %s32, %s23
      %p34 = scmp.ge.s32.totalorder %s33, 2
      %s35 = scalar_select %p34, 0, %s33
      %s37 = sadd.s32 %s36, 1
      %p40 = scmp.eq.s32.totalorder %s16, 1
      %p41 = scmp.ne.s32.totalorder %s36, %s38
      %p42 = scmp.eq.s32.totalorder %s16, 0
      %p43 = por %p41, %p42
      %p44 = scmp.ne.s32.totalorder %s36, %s38
      %p45 = scmp.eq.s32.totalorder %s21, 1
      %p46 = por %p44, %p45
      %p47 = scmp.ne.s32.totalorder %s38, %s39
      %p48 = scmp.eq.s32.totalorder %s21, 0
      %p49 = por %p47, %p48
      %p50 = scmp.ne.s32.totalorder %s38, %s39
      %p51 = scmp.eq.s32.totalorder %s22, 1
      %p52 = por %p50, %p51
      %p54 = scmp.ne.s32.totalorder %s39, %s53
      %p55 = scmp.eq.s32.totalorder %s22, 0
      %p56 = por %p54, %p55
      %s57 = ssub.s32 %s24, %s31
      %s58 = ssub.s32 %s23, %s35
      %s59 = sor.u32 %s57, %s58
      %p60 = scmp.eq.s32.totalorder %s59, 0
      %s62 = sadd.s32 %s61, 1
      %s63 = scalar_select %p60, %s61, %s62
      %p66 = pneg %p60
      %p67 = scmp.eq.s32.totalorder %s16, 1
      %p68 = por %p66, %p67
      %p69 = scmp.ne.s32.totalorder %s61, %s64
      %p70 = scmp.eq.s32.totalorder %s16, 0
      %p71 = por %p69, %p70
      %p72 = scmp.ne.s32.totalorder %s61, %s64
      %p73 = scmp.eq.s32.totalorder %s21, 1
      %p74 = por %p72, %p73
      %p75 = scmp.ne.s32.totalorder %s64, %s65
      %p76 = scmp.eq.s32.totalorder %s21, 0
      %p77 = por %p75, %p76
      %p78 = scmp.ne.s32.totalorder %s64, %s65
      %p79 = scmp.eq.s32.totalorder %s22, 1
      %p80 = por %p78, %p79
      %p82 = scmp.ne.s32.totalorder %s65, %s81
      %p83 = scmp.eq.s32.totalorder %s22, 0
      %p84 = por %p82, %p83
      %s85 = ssub.s32 %s23, %s35
      %p86 = scmp.eq.s32.totalorder %s85, 0
      %s88 = sadd.s32 %s87, 1
      %s89 = scalar_select %p86, %s87, %s88
      %p92 = pneg %p86
      %p93 = scmp.eq.s32.totalorder %s16, 1
      %p94 = por %p92, %p93
      %p95 = scmp.ne.s32.totalorder %s87, %s90
      %p96 = scmp.eq.s32.totalorder %s16, 0
      %p97 = por %p95, %p96
      %p98 = scmp.ne.s32.totalorder %s87, %s90
      %p99 = scmp.eq.s32.totalorder %s21, 1
      %p100 = por %p98, %p99
      %p101 = scmp.ne.s32.totalorder %s90, %s91
      %p102 = scmp.eq.s32.totalorder %s21, 0
      %p103 = por %p101, %p102
      %p104 = scmp.ne.s32.totalorder %s90, %s91
      %p105 = scmp.eq.s32.totalorder %s22, 1
      %p106 = por %p104, %p105
      %p108 = scmp.ne.s32.totalorder %s91, %s107
      %p109 = scmp.eq.s32.totalorder %s22, 0
      %p110 = por %p108, %p109
      %s111 = ssub.s32 %s24, %s31
      %s112 = ssub.s32 %s23, %s35
      %s113 = sor.u32 %s111, %s112
      %p114 = scmp.eq.s32.totalorder %s113, 0
      %s116 = sadd.s32 %s115, 1
      %s117 = scalar_select %p114, %s115, %s116
      %p120 = pneg %p114
      %p121 = scmp.eq.s32.totalorder %s16, 1
      %p122 = por %p120, %p121
      %p123 = scmp.ne.s32.totalorder %s115, %s118
      %p124 = scmp.eq.s32.totalorder %s16, 0
      %p125 = por %p123, %p124
      %p126 = scmp.ne.s32.totalorder %s115, %s118
      %p127 = scmp.eq.s32.totalorder %s21, 1
      %p128 = por %p126, %p127
      %p129 = scmp.ne.s32.totalorder %s118, %s119
      %p130 = scmp.eq.s32.totalorder %s21, 0
      %p131 = por %p129, %p130
      %p132 = scmp.ne.s32.totalorder %s118, %s119
      %p133 = scmp.eq.s32.totalorder %s22, 1
      %p134 = por %p132, %p133
      %p136 = scmp.ne.s32.totalorder %s119, %s135
      %p137 = scmp.eq.s32.totalorder %s22, 0
      %p138 = por %p136, %p137
      %p139 = scmp.le.s32.totalorder 1, %s16
      %p140 = scmp.lt.s32.totalorder %s16, 3
      %p141 = pnand %p139, %p140
      %p142 = pneg %p141
      // Predicated region
      $region9: #{tpu_custom_call.1} parent=5 // pred_check
        _
      $region10: #{tpu_custom_call.1} parent=5 // pred_check_branch
        %144 = sbr.rel (%p141) target = $region12
      $region11: #{tpu_custom_call.1} parent=5 // pred_region
        %s145 = ssub.s32 %s16, 1
        // Predicated region
        $region13: #{tpu_custom_call.1} parent=11 // pred_check
          %p146 = pneg %p49
        $region14: #{tpu_custom_call.1} parent=11 // pred_check_branch
          %148 = sbr.rel (%p146) target = $region16
        $region15: #{tpu_custom_call.1} parent=11 // pred_region
          _
        $region16: #{tpu_custom_call.1} parent=11 // pred_fallthru
          _
      $region12: #{tpu_custom_call.1} parent=5 // pred_fallthru
        _
      %p149 = scmp.lt.s32.totalorder %s16, 2
      // Predicated region
      $region17: #{tpu_custom_call.1} parent=5 // pred_check
        %p150 = pneg %p149
      $region18: #{tpu_custom_call.1} parent=5 // pred_check_branch
        %152 = sbr.rel (%p150) target = $region20
      $region19: #{tpu_custom_call.1} parent=5 // pred_region
        // Predicated region
        $region21: #{tpu_custom_call.1} parent=19 // pred_check
          %p153 = pneg %p71
        $region22: #{tpu_custom_call.1} parent=19 // pred_check_branch
          %155 = sbr.rel (%p153) target = $region24
        $region23: #{tpu_custom_call.1} parent=19 // pred_region
          %s156 = sand.u32 %s61, 1
          %s157 = scalar_lea.sflag [#allocation4], %s156
          %s158 = sand.u32 %s61, 1
          %s159 = smul.addr %s158, 2
          %s160 = scalar_lea.vmem [#allocation3], %s159
          %s162 = ssub.s32 32, 32
          %163 = vsyncadd %s157, %s162
          %s164 = smul.addr %s24, 2
          %s165 = sadd.s32 %s23, %s164
          %s166 = smul.addr %s165, 32
          %s167 = scalar_lea.hbm %s1, %s166
          %s169 = sshll.u32 %s160, 4
          %s170 = int_to_ptr.vmem [resolvable:$true] %s169
          %172 = dma.hbm_to_vmem [thread:$0]  %s167, 32, %s170, %s157
        $region24: #{tpu_custom_call.1} parent=19 // pred_fallthru
          _
        // Predicated region
        $region25: #{tpu_custom_call.1} parent=19 // pred_check
          %p173 = pneg %p97
        $region26: #{tpu_custom_call.1} parent=19 // pred_check_branch
          %175 = sbr.rel (%p173) target = $region28
        $region27: #{tpu_custom_call.1} parent=19 // pred_region
          %p176 = scmp.lt.s32.totalorder %s23, 1
          %s177 = scalar_select %p176, %s23, 1
          %s178 = scalar_lea.vmem %s2, %s177
        $region28: #{tpu_custom_call.1} parent=19 // pred_fallthru
          _
      $region20: #{tpu_custom_call.1} parent=5 // pred_fallthru
        _
      %p179 = scmp.le.s32.totalorder 1, %s16
      %p180 = scmp.lt.s32.totalorder %s16, 3
      %p181 = pnand %p179, %p180
      %p182 = pneg %p181
      // Predicated region
      $region29: #{tpu_custom_call.1} parent=5 // pred_check
        _
      $region30: #{tpu_custom_call.1} parent=5 // pred_check_branch
        %184 = sbr.rel (%p181) target = $region32
      $region31: #{tpu_custom_call.1} parent=5 // pred_region
        %s185 = ssub.s32 %s16, 1
        %s186 = sand.u32 %s64, 1
        %s187 = scalar_lea.sflag [#allocation4], %s186
        %s188 = sand.u32 %s64, 1
        %s189 = smul.addr %s188, 2
        %s190 = scalar_lea.vmem [#allocation3], %s189
        // Predicated region
        $region33: #{tpu_custom_call.1} parent=31 // pred_check
          %p191 = pneg %p77
        $region34: #{tpu_custom_call.1} parent=31 // pred_check_branch
          %193 = sbr.rel (%p191) target = $region36
        $region35: #{tpu_custom_call.1} parent=31 // pred_region
          %194 = dma.done %s187, 32
        $region36: #{tpu_custom_call.1} parent=31 // pred_fallthru
          _
        %p195 = pneg %p49
        %p196 = pneg %p46
        %s197 = sand.u32 %s64, 1
        %s198 = scalar_lea.sflag [#allocation4], %s197
        %s199 = sand.u32 %s64, 1
        %s200 = smul.addr %s199, 2
        %s201 = scalar_lea.vmem [#allocation3], %s200
        %p202 = pneg %p77
        %p203 = pneg %p74
        %p204 = scmp.lt.s32.totalorder %s25, 1
        %s205 = scalar_select %p204, %s25, 1
        %s206 = scalar_lea.vmem %s2, %s205
        %p207 = pneg %p103
        %p208 = pneg %p100
        %p209 = pneg %p131
        %p210 = pneg %p128
        %s211 = sand.u32 %s118, 1
        %s212 = scalar_lea.sflag [#allocation5], %s211
        %s213 = sand.u32 %s118, 1
        %s214 = smul.addr %s213, 2
        %s215 = scalar_lea.vmem [#allocation6], %s214
        %p216 = scmp.lt.s32.totalorder %s25, 1
        %s217 = scalar_select %p216, %s25, 1
        %s218 = scalar_lea.vmem %s2, %s217
        %v219 = vld [vmem:[%s190] sm:$0x3]
        %s220 = sld [smem:[#allocation2]]
        %v221 = vld [vmem:[%s218] sm:$0x1]
        %v222 = vstv %s220
        %v223 = vmul.f32 %v222, %v221
        %v225 = vlaneseq
        %v226 = vshrl.u32 %v225, 7
        %v227 = vsub.s32 0, %v226
        %v228 = vrot.slane %v223, %v227
        %v230 = vadd.f32 %v219, %v228
        %231 = vst [vmem:[%s215] sm:$0x3] %v230
        %s232 = sand.u32 %s118, 1
        %s233 = scalar_lea.sflag [#allocation5], %s232
        %s234 = sand.u32 %s118, 1
        %s235 = smul.addr %s234, 2
        %s236 = scalar_lea.vmem [#allocation6], %s235
        // Predicated region
        $region37: #{tpu_custom_call.1} parent=31 // pred_check
          %p237 = pneg %p128
        $region38: #{tpu_custom_call.1} parent=31 // pred_check_branch
          %239 = sbr.rel (%p237) target = $region40
        $region39: #{tpu_custom_call.1} parent=31 // pred_region
          %s241 = ssub.s32 32, 32
          %242 = vsyncadd %s233, %s241
          %s243 = smul.addr %s26, 2
          %s244 = sadd.s32 %s25, %s243
          %s245 = smul.addr %s244, 32
          %s246 = scalar_lea.hbm %s3, %s245
          %s248 = sshll.u32 %s236, 4
          %s249 = int_to_ptr.vmem [resolvable:$true] %s248
          %251 = dma.vmem_to_hbm [thread:$0]  %s249, 32, %s246, %s233
        $region40: #{tpu_custom_call.1} parent=31 // pred_fallthru
          _
      $region32: #{tpu_custom_call.1} parent=5 // pred_fallthru
        _
      %p252 = scmp.le.s32.totalorder 2, %s16
      // Predicated region
      $region41: #{tpu_custom_call.1} parent=5 // pred_check
        %p253 = pneg %p252
      $region42: #{tpu_custom_call.1} parent=5 // pred_check_branch
        %255 = sbr.rel (%p253) target = $region44
      $region43: #{tpu_custom_call.1} parent=5 // pred_region
        %s256 = ssub.s32 %s16, 2
        // Predicated region
        $region45: #{tpu_custom_call.1} parent=43 // pred_check
          %p257 = pneg %p134
        $region46: #{tpu_custom_call.1} parent=43 // pred_check_branch
          %259 = sbr.rel (%p257) target = $region48
        $region47: #{tpu_custom_call.1} parent=43 // pred_region
          %s260 = sand.u32 %s119, 1
          %s261 = scalar_lea.sflag [#allocation5], %s260
          %s262 = sand.u32 %s119, 1
          %s263 = smul.addr %s262, 2
          %s264 = scalar_lea.vmem [#allocation6], %s263
          %265 = dma.done %s261, 32
        $region48: #{tpu_custom_call.1} parent=43 // pred_fallthru
          _
      $region44: #{tpu_custom_call.1} parent=5 // pred_fallthru
        _
    $region6: #{tpu_custom_call.1} parent=1 // loop_footer
      %s20 = sadd.s32 1, %s16
    $region7: #{tpu_custom_call.1} parent=1 // loop_footer_branch
      %15 = sbr.rel target = $region3
    $region8: #{tpu_custom_call.1} parent=1 // loop_exit
      _
    %266 = vsyncpa [#allocation4], 1
    %s267 = scalar_lea.sflag [#allocation4], 1
    %268 = vsyncpa %s267, 1
    %269 = vsyncpa [#allocation5], 1
    %s270 = scalar_lea.sflag [#allocation5], 1
    %271 = vsyncpa %s270, 1

</llo_original>
